<compile_context>
chip_gen: v6e
topology: v6e:2x2x1
jax: 0.10.0
libtpu: 0.0.40
codegen_flags: <defaults>
</compile_context>

<pallas_src>
import functools

import jax
import jax.numpy as jnp
from jax.experimental import pallas as pl
from jax.experimental.pallas import tpu as pltpu

IN_FEATURES = 80
OUT_FEATURES = 256
DEFAULT_BLOCK_ROWS = 1024  # rows per grid step (sweep 512-2048 if tuning)
MIN_GRID_STEPS = 4         # keep >=4 steps so v7x's two TCs both get work


def _round_up(x, m):
    return ((x + m - 1) // m) * m


def prenet_kernel(x_ref, w1_ref, b1_ref, w2_ref, b2_ref, o_ref):
    """One batch tile: relu(relu(x @ W1 + b1) @ W2 + b2), f32 accumulation."""
    # fc1: (TB, K) @ (K, N) -> f32 acc; cast x to weight dtype (no-op if bf16).
    x = x_ref[...].astype(w1_ref.dtype)
    h = jnp.dot(x, w1_ref[...], preferred_element_type=jnp.float32)
    h = jnp.maximum(h + b1_ref[...], 0.0)   # bias is f32 (1, N), broadcasts
    # dropout(p=0) -> identity
    # fc2: (TB, N) @ (N, N) -> f32 acc
    h = h.astype(w2_ref.dtype)
    y = jnp.dot(h, w2_ref[...], preferred_element_type=jnp.float32)
    y = jnp.maximum(y + b2_ref[...], 0.0)
    # dropout(p=0) -> identity
    o_ref[...] = y.astype(o_ref.dtype)


def prepare_prenet_params(w1, b1, w2, b2, *, param_dtype=jnp.bfloat16):
    """One-time parameter prep (at load time, not per forward call).

    Inputs use the PyTorch nn.Linear layout: w (out, in), b (out,).
    Returns weights transposed to (in, out) in `param_dtype` and biases as
    (1, out) f32 rows for lane-aligned broadcast.
    """
    w1_t = jnp.asarray(w1).T.astype(param_dtype)                  # (K, N)
    w2_t = jnp.asarray(w2).T.astype(param_dtype)                  # (N, N)
    b1_2d = jnp.asarray(b1).reshape(1, -1).astype(jnp.float32)    # (1, N)
    b2_2d = jnp.asarray(b2).reshape(1, -1).astype(jnp.float32)    # (1, N)
    return w1_t, b1_2d, w2_t, b2_2d


@functools.partial(jax.jit, static_argnames=("block_rows", "out_dtype"))
def prenet_forward(x, params, *, block_rows=DEFAULT_BLOCK_ROWS,
                   out_dtype=jnp.float32):
    """x: (B, 80) frames (f32 or bf16); params from prepare_prenet_params.

    out_dtype=jnp.bfloat16 halves output HBM traffic if downstream tolerates it.
    """
    w1_t, b1_2d, w2_t, b2_2d = params
    B, K = x.shape
    N = w1_t.shape[1]

    # Batch tile: multiple of 8 sublanes (hard layout requirement), large
    # enough to amortize per-step overhead, small enough to keep >= 4 steps.
    tb = min(_round_up(max(block_rows, 8), 8),
             _round_up(pl.cdiv(B, MIN_GRID_STEPS), 8))
    tb = max(tb, 8)
    grid = (pl.cdiv(B, tb),)  # no padding: Pallas clips the partial last block

    out = pl.pallas_call(
        prenet_kernel,
        out_shape=jax.ShapeDtypeStruct((B, N), out_dtype),
        grid_spec=pltpu.PrefetchScalarGridSpec(
            num_scalar_prefetch=0,
            grid=grid,
            in_specs=[
                # activation tile, pipelined along the batch axis
                pl.BlockSpec((tb, K), lambda i: (i, 0)),
                # weights / biases: constant index map -> DMA'd once, resident
                pl.BlockSpec((K, N), lambda i: (0, 0)),
                pl.BlockSpec((1, N), lambda i: (0, 0)),
                pl.BlockSpec((N, N), lambda i: (0, 0)),
                pl.BlockSpec((1, N), lambda i: (0, 0)),
            ],
            out_specs=pl.BlockSpec((tb, N), lambda i: (i, 0)),
        ),
        compiler_params=pltpu.CompilerParams(
            dimension_semantics=("parallel",),  # v7x: shard batch over 2 TCs
        ),
    )(x, w1_t, b1_2d, w2_t, b2_2d)

    return out


if __name__ == "__main__":
    key = jax.random.PRNGKey(0)
    k_x, k_w1, k_b1, k_w2, k_b2 = jax.random.split(key, 5)

    # Small demo batch of 80-d spectrogram frames.
    B = 16
    x = jax.random.normal(k_x, (B, IN_FEATURES), dtype=jnp.float32)

    # Deterministic parameters in PyTorch nn.Linear layout: w (out, in), b (out,)
    w1 = jax.random.normal(k_w1, (OUT_FEATURES, IN_FEATURES), dtype=jnp.float32) * 0.05
    b1 = jax.random.normal(k_b1, (OUT_FEATURES,), dtype=jnp.float32) * 0.05
    w2 = jax.random.normal(k_w2, (OUT_FEATURES, OUT_FEATURES), dtype=jnp.float32) * 0.05
    b2 = jax.random.normal(k_b2, (OUT_FEATURES,), dtype=jnp.float32) * 0.05

    # One-time parameter prep (transpose + bf16 cast) — NOT per forward call.
    params = prepare_prenet_params(w1, b1, w2, b2, param_dtype=jnp.bfloat16)

    # Plain f32 JAX reference; kernel uses bf16 MXU operands -> loose tolerance.
    ref = jnp.maximum(jnp.maximum(x @ w1.T + b1, 0.0) @ w2.T + b2, 0.0)

    # 1) Module-parity path: f32 output.
    out = prenet_forward(x, params)
    jax.block_until_ready(out)
    assert out.shape == (B, OUT_FEATURES)
    assert out.dtype == jnp.float32
    assert jnp.allclose(out, ref, atol=2e-2, rtol=2e-2), (
        float(jnp.max(jnp.abs(out - ref)))
    )

    # 2) Memory-bound fast path: bf16 output (the big HBM-traffic win).
    out_bf16 = prenet_forward(x, params, out_dtype=jnp.bfloat16)
    jax.block_until_ready(out_bf16)
    assert out_bf16.dtype == jnp.bfloat16
    assert jnp.allclose(out_bf16.astype(jnp.float32), ref, atol=5e-2, rtol=5e-2)

    # 3) Ragged batch (B not a multiple of the tile): relies on Pallas clipping
    #    the partial last block — no wrapper pad/slice copies.
    B2 = 13
    out2 = prenet_forward(x[:B2], params)
    jax.block_until_ready(out2)
    assert out2.shape == (B2, OUT_FEATURES)
    assert jnp.allclose(out2, ref[:B2], atol=2e-2, rtol=2e-2)

    print("KERNEL_OK")
</pallas_src>

<mosaic_0001>
module attributes {stable_mosaic.version = 11 : i64} {
  func.func @prenet_kernel(%arg0: i32, %arg1: memref<8x80xf32, #tpu.memory_space<vmem>>, %arg2: memref<80x256xbf16, #tpu.memory_space<vmem>>, %arg3: memref<1x256xf32, #tpu.memory_space<vmem>>, %arg4: memref<256x256xbf16, #tpu.memory_space<vmem>>, %arg5: memref<1x256xf32, #tpu.memory_space<vmem>>, %arg6: memref<8x256xf32, #tpu.memory_space<vmem>>) attributes {dimension_semantics = [#tpu.dimension_semantics<parallel>], iteration_bounds = array<i64: 2>, scalar_prefetch = 0 : i64, scratch_operands = 0 : i64, tpu.core_type = #tpu.core_type<tc>, window_params = [{transform_indices = @transform_0, window_bounds = array<i64: 8, 80>}, {pipeline_mode = #tpu.pipeline_mode<synchronous>, transform_indices = @transform_1, window_bounds = array<i64: 80, 256>}, {pipeline_mode = #tpu.pipeline_mode<synchronous>, transform_indices = @transform_2, window_bounds = array<i64: 1, 256>}, {pipeline_mode = #tpu.pipeline_mode<synchronous>, transform_indices = @transform_3, window_bounds = array<i64: 256, 256>}, {pipeline_mode = #tpu.pipeline_mode<synchronous>, transform_indices = @transform_4, window_bounds = array<i64: 1, 256>}, {transform_indices = @transform_5, window_bounds = array<i64: 8, 256>}]} {
    %c0 = arith.constant 0 : index
    %c0_0 = arith.constant 0 : index
    %0 = vector.load %arg1[%c0, %c0_0] : memref<8x80xf32, #tpu.memory_space<vmem>>, vector<8x80xf32>
    %1 = arith.truncf %0 : vector<8x80xf32> to vector<8x80xbf16>
    %c0_1 = arith.constant 0 : index
    %c0_2 = arith.constant 0 : index
    %2 = vector.load %arg2[%c0_1, %c0_2] : memref<80x256xbf16, #tpu.memory_space<vmem>>, vector<80x256xbf16>
    %cst = arith.constant dense<0.000000e+00> : vector<8x256xf32>
    %3 = tpu.matmul %1, %2, %cst {dimension_numbers = #tpu.dot_dimension_numbers<[1], [0], [0], [1], [0, 0, 1, 1], [], []>} : vector<8x80xbf16>, vector<80x256xbf16>, vector<8x256xf32> -> vector<8x256xf32>
    %c0_3 = arith.constant 0 : index
    %c0_4 = arith.constant 0 : index
    %4 = vector.load %arg3[%c0_3, %c0_4] : memref<1x256xf32, #tpu.memory_space<vmem>>, vector<1x256xf32>
    %5 = vector.broadcast %4 : vector<1x256xf32> to vector<8x256xf32>
    %6 = arith.addf %3, %5 : vector<8x256xf32>
    %cst_5 = arith.constant 0.000000e+00 : f32
    %7 = vector.broadcast %cst_5 : f32 to vector<8x256xf32>
    %8 = arith.maximumf %6, %7 : vector<8x256xf32>
    %9 = arith.truncf %8 : vector<8x256xf32> to vector<8x256xbf16>
    %c0_6 = arith.constant 0 : index
    %c0_7 = arith.constant 0 : index
    %10 = vector.load %arg4[%c0_6, %c0_7] : memref<256x256xbf16, #tpu.memory_space<vmem>>, vector<256x256xbf16>
    %cst_8 = arith.constant dense<0.000000e+00> : vector<8x256xf32>
    %11 = tpu.matmul %9, %10, %cst_8 {dimension_numbers = #tpu.dot_dimension_numbers<[1], [0], [0], [1], [0, 0, 1, 1], [], []>} : vector<8x256xbf16>, vector<256x256xbf16>, vector<8x256xf32> -> vector<8x256xf32>
    %c0_9 = arith.constant 0 : index
    %c0_10 = arith.constant 0 : index
    %12 = vector.load %arg5[%c0_9, %c0_10] : memref<1x256xf32, #tpu.memory_space<vmem>>, vector<1x256xf32>
    %13 = vector.broadcast %12 : vector<1x256xf32> to vector<8x256xf32>
    %14 = arith.addf %11, %13 : vector<8x256xf32>
    %cst_11 = arith.constant 0.000000e+00 : f32
    %15 = vector.broadcast %cst_11 : f32 to vector<8x256xf32>
    %16 = arith.maximumf %14, %15 : vector<8x256xf32>
    %c0_12 = arith.constant 0 : index
    %c0_13 = arith.constant 0 : index
    %17 = vector.load %arg6[%c0_12, %c0_13] : memref<8x256xf32, #tpu.memory_space<vmem>>, vector<8x256xf32>
    tpu.vector_store %arg6[%c0_12, %c0_13], %16 {strides = array<i32>} : memref<8x256xf32, #tpu.memory_space<vmem>>, vector<8x256xf32>,
    return
  }
  func.func @transform_0(%arg0: i32) -> (i32, i32) {
    %c0_i32 = arith.constant 0 : i32
    %c0_i32_0 = arith.constant 0 : i32
    return %arg0, %c0_i32 : i32, i32
  }
  func.func @transform_1(%arg0: i32) -> (i32, i32) {
    %c0_i32 = arith.constant 0 : i32
    %c0_i32_0 = arith.constant 0 : i32
    %c0_i32_1 = arith.constant 0 : i32
    return %c0_i32, %c0_i32_0 : i32, i32
  }
  func.func @transform_2(%arg0: i32) -> (i32, i32) {
    %c0_i32 = arith.constant 0 : i32
    %c0_i32_0 = arith.constant 0 : i32
    %c0_i32_1 = arith.constant 0 : i32
    return %c0_i32, %c0_i32_0 : i32, i32
  }
  func.func @transform_3(%arg0: i32) -> (i32, i32) {
    %c0_i32 = arith.constant 0 : i32
    %c0_i32_0 = arith.constant 0 : i32
    %c0_i32_1 = arith.constant 0 : i32
    return %c0_i32, %c0_i32_0 : i32, i32
  }
  func.func @transform_4(%arg0: i32) -> (i32, i32) {
    %c0_i32 = arith.constant 0 : i32
    %c0_i32_0 = arith.constant 0 : i32
    %c0_i32_1 = arith.constant 0 : i32
    return %c0_i32, %c0_i32_0 : i32, i32
  }
  func.func @transform_5(%arg0: i32) -> (i32, i32) {
    %c0_i32 = arith.constant 0 : i32
    %c0_i32_0 = arith.constant 0 : i32
    return %arg0, %c0_i32 : i32, i32
  }
}

</mosaic_0001>

<llo_original>
// kernel: prenet_forward.1
$region0: #{prenet_forward.1}
  #allocation0 [shape = 'u32[]', space=smem, size = 0x4, offset = 0x4, fixed_abs, tag = 'smem constant byte address 0x4 - core index']
  #allocation1 [shape = 'u32[144,128]{1,0:T(1,128)}', space=vmem, size = 0x12000, scoped, tag = 'internal scratch']
  %s0 = inlined_call_operand.hbm [shape: f32[16,80], index: 0, kind: input, shape index: {}]
  %s1 = inlined_call_operand.hbm [shape: bf16[80,256], index: 1, kind: input, shape index: {}]
  %s2 = inlined_call_operand.vmem [shape: f32[1,256], index: 2, kind: input, shape index: {}]
  %s3 = inlined_call_operand.hbm [shape: bf16[256,256], index: 3, kind: input, shape index: {}]
  %s4 = inlined_call_operand.vmem [shape: f32[1,256], index: 4, kind: input, shape index: {}]
  %s5 = inlined_call_operand.hbm [shape: f32[16,256], index: 5, kind: output, shape index: {}]
  %s6 = sld [smem:[#allocation0]]
  $region65: #{prenet_forward.1} parent=0
    _
  %s8 = ssub.s32 1, %s6
  %s9 = scalar_select 0, %s8, %s6
  $region1: #{prenet_forward.1} parent=0
    #allocation2 [shape = 'u8[8192]{0}', space=vmem, size = 0x2000, scoped, tag = 'input window, operand 0']
    #allocation3 [shape = 's32[2]{0}', space=sflag, size = 0x8, scoped, tag = 'scoped memory for prenet_forward.1']
    #allocation4 [shape = 's32[2]{0}', space=sflag, size = 0x8, scoped, tag = 'scoped memory for prenet_forward.1']
    #allocation5 [shape = 'u8[40960]{0}', space=vmem, size = 0xa000, scoped, tag = 'input window, operand 1, single buffered']
    #allocation6 [shape = 's32[1]{0}', space=sflag, size = 0x4, scoped, tag = 'scoped memory for prenet_forward.1']
    #allocation7 [shape = 'u8[131072]{0}', space=vmem, size = 0x20000, scoped, tag = 'input window, operand 3, single buffered']
    #allocation8 [shape = 'u8[16384]{0}', space=vmem, size = 0x4000, scoped, tag = 'output window, operand 0']
    %10 = vsyncpa [#allocation3], 0
    %s11 = scalar_lea.sflag [#allocation3], 1
    %12 = vsyncpa %s11, 0
    %13 = vsyncpa [#allocation6], 0
    %14 = vsyncpa [#allocation4], 0
    %s15 = scalar_lea.sflag [#allocation4], 1
    %16 = vsyncpa %s15, 0
    loop: start=0, step=1, limit=4
    $region2: #{prenet_forward.1} parent=1 // loop_pre_header
      _
    $region3: #{prenet_forward.1} parent=1 // loop_header
      %s18 = sphi 0, %s22
      %p19 = scmp.ge.s32.totalorder %s18, 4
      %s28 = sphi 0, %s30
      %s31 = sphi 0, %s28
      %s32 = sphi 0, %s31
      %s48 = sphi 0, %s32
      %s52 = sphi 0, %s52
      %s54 = sphi 0, %s52
      %s55 = sphi 0, %s54
      %s69 = sphi 0, %s55
      %s73 = sphi 0, %s73
      %s75 = sphi 0, %s73
      %s76 = sphi 0, %s75
      %s90 = sphi 0, %s76
      %s94 = sphi 0, %s94
      %s96 = sphi 0, %s94
      %s97 = sphi 0, %s96
      %s111 = sphi 0, %s97
      %s115 = sphi 0, %s115
      %s117 = sphi 0, %s115
      %s118 = sphi 0, %s117
      %s132 = sphi 0, %s118
      %s138 = sphi 0, %s140
      %s141 = sphi 0, %s138
      %s142 = sphi 0, %s141
      %s158 = sphi 0, %s142
    $region4: #{prenet_forward.1} parent=1 // loop_header_branch
      %21 = sbr.rel (%p19) target = $region8
    $region5: #{prenet_forward.1} parent=1 // loop_body
      %s23 = ssub.s32 %s18, 1
      %s24 = ssub.s32 %s18, 2
      %s25 = sadd.s32 %s18, 1
      %s26 = ssub.s32 %s18, %s25
      %p27 = scmp.eq.s32.totalorder %s26, 0
      %s29 = sadd.s32 %s28, 1
      %s30 = scalar_select %p27, %s28, %s29
      %p33 = pneg %p27
      %p34 = scmp.eq.s32.totalorder %s18, 1
      %p35 = por %p33, %p34
      %p36 = scmp.ne.s32.totalorder %s28, %s31
      %p37 = scmp.eq.s32.totalorder %s18, 0
      %p38 = por %p36, %p37
      %p39 = scmp.ne.s32.totalorder %s28, %s31
      %p40 = scmp.eq.s32.totalorder %s23, 1
      %p41 = por %p39, %p40
      %p42 = scmp.ne.s32.totalorder %s31, %s32
      %p43 = scmp.eq.s32.totalorder %s23, 0
      %p44 = por %p42, %p43
      %p45 = scmp.ne.s32.totalorder %s31, %s32
      %p46 = scmp.eq.s32.totalorder %s24, 1
      %p47 = por %p45, %p46
      %p49 = scmp.ne.s32.totalorder %s32, %s48
      %p50 = scmp.eq.s32.totalorder %s24, 0
      %p51 = por %p49, %p50
      %s53 = sadd.s32 %s52, 1
      %p56 = scmp.eq.s32.totalorder %s18, 1
      %p57 = scmp.ne.s32.totalorder %s52, %s54
      %p58 = scmp.eq.s32.totalorder %s18, 0
      %p59 = por %p57, %p58
      %p60 = scmp.ne.s32.totalorder %s52, %s54
      %p61 = scmp.eq.s32.totalorder %s23, 1
      %p62 = por %p60, %p61
      %p63 = scmp.ne.s32.totalorder %s54, %s55
      %p64 = scmp.eq.s32.totalorder %s23, 0
      %p65 = por %p63, %p64
      %p66 = scmp.ne.s32.totalorder %s54, %s55
      %p67 = scmp.eq.s32.totalorder %s24, 1
      %p68 = por %p66, %p67
      %p70 = scmp.ne.s32.totalorder %s55, %s69
      %p71 = scmp.eq.s32.totalorder %s24, 0
      %p72 = por %p70, %p71
      %s74 = sadd.s32 %s73, 1
      %p77 = scmp.eq.s32.totalorder %s18, 1
      %p78 = scmp.ne.s32.totalorder %s73, %s75
      %p79 = scmp.eq.s32.totalorder %s18, 0
      %p80 = por %p78, %p79
      %p81 = scmp.ne.s32.totalorder %s73, %s75
      %p82 = scmp.eq.s32.totalorder %s23, 1
      %p83 = por %p81, %p82
      %p84 = scmp.ne.s32.totalorder %s75, %s76
      %p85 = scmp.eq.s32.totalorder %s23, 0
      %p86 = por %p84, %p85
      %p87 = scmp.ne.s32.totalorder %s75, %s76
      %p88 = scmp.eq.s32.totalorder %s24, 1
      %p89 = por %p87, %p88
      %p91 = scmp.ne.s32.totalorder %s76, %s90
      %p92 = scmp.eq.s32.totalorder %s24, 0
      %p93 = por %p91, %p92
      %s95 = sadd.s32 %s94, 1
      %p98 = scmp.eq.s32.totalorder %s18, 1
      %p99 = scmp.ne.s32.totalorder %s94, %s96
      %p100 = scmp.eq.s32.totalorder %s18, 0
      %p101 = por %p99, %p100
      %p102 = scmp.ne.s32.totalorder %s94, %s96
      %p103 = scmp.eq.s32.totalorder %s23, 1
      %p104 = por %p102, %p103
      %p105 = scmp.ne.s32.totalorder %s96, %s97
      %p106 = scmp.eq.s32.totalorder %s23, 0
      %p107 = por %p105, %p106
      %p108 = scmp.ne.s32.totalorder %s96, %s97
      %p109 = scmp.eq.s32.totalorder %s24, 1
      %p110 = por %p108, %p109
      %p112 = scmp.ne.s32.totalorder %s97, %s111
      %p113 = scmp.eq.s32.totalorder %s24, 0
      %p114 = por %p112, %p113
      %s116 = sadd.s32 %s115, 1
      %p119 = scmp.eq.s32.totalorder %s18, 1
      %p120 = scmp.ne.s32.totalorder %s115, %s117
      %p121 = scmp.eq.s32.totalorder %s18, 0
      %p122 = por %p120, %p121
      %p123 = scmp.ne.s32.totalorder %s115, %s117
      %p124 = scmp.eq.s32.totalorder %s23, 1
      %p125 = por %p123, %p124
      %p126 = scmp.ne.s32.totalorder %s117, %s118
      %p127 = scmp.eq.s32.totalorder %s23, 0
      %p128 = por %p126, %p127
      %p129 = scmp.ne.s32.totalorder %s117, %s118
      %p130 = scmp.eq.s32.totalorder %s24, 1
      %p131 = por %p129, %p130
      %p133 = scmp.ne.s32.totalorder %s118, %s132
      %p134 = scmp.eq.s32.totalorder %s24, 0
      %p135 = por %p133, %p134
      %s136 = ssub.s32 %s18, %s25
      %p137 = scmp.eq.s32.totalorder %s136, 0
      %s139 = sadd.s32 %s138, 1
      %s140 = scalar_select %p137, %s138, %s139
      %p143 = pneg %p137
      %p144 = scmp.eq.s32.totalorder %s18, 1
      %p145 = por %p143, %p144
      %p146 = scmp.ne.s32.totalorder %s138, %s141
      %p147 = scmp.eq.s32.totalorder %s18, 0
      %p148 = por %p146, %p147
      %p149 = scmp.ne.s32.totalorder %s138, %s141
      %p150 = scmp.eq.s32.totalorder %s23, 1
      %p151 = por %p149, %p150
      %p152 = scmp.ne.s32.totalorder %s141, %s142
      %p153 = scmp.eq.s32.totalorder %s23, 0
      %p154 = por %p152, %p153
      %p155 = scmp.ne.s32.totalorder %s141, %s142
      %p156 = scmp.eq.s32.totalorder %s24, 1
      %p157 = por %p155, %p156
      %p159 = scmp.ne.s32.totalorder %s142, %s158
      %p160 = scmp.eq.s32.totalorder %s24, 0
      %p161 = por %p159, %p160
      %p162 = scmp.le.s32.totalorder 1, %s18
      %p163 = scmp.lt.s32.totalorder %s18, 3
      %p164 = pnand %p162, %p163
      %p165 = pneg %p164
      // Predicated region
      $region9: #{prenet_forward.1} parent=5 // pred_check
        _
      $region10: #{prenet_forward.1} parent=5 // pred_check_branch
        %167 = sbr.rel (%p164) target = $region12
      $region11: #{prenet_forward.1} parent=5 // pred_region
        %s168 = ssub.s32 %s18, 1
        // Predicated region
        $region13: #{prenet_forward.1} parent=11 // pred_check
          %p169 = pneg %p65
        $region14: #{prenet_forward.1} parent=11 // pred_check_branch
          %171 = sbr.rel (%p169) target = $region16
        $region15: #{prenet_forward.1} parent=11 // pred_region
          %s173 = ssub.s32 1280, 1280
          %174 = vsyncadd [#allocation6], %s173
          %s175 = sshll.u32 [#allocation5], 4
          %s176 = int_to_ptr.vmem [resolvable:$true] %s175
          %181 = dma.hbm_to_vmem [thread:$0]  %s1, 1280, %s176, [#allocation6], 128, 128, 8
        $region16: #{prenet_forward.1} parent=11 // pred_fallthru
          _
        // Predicated region
        $region17: #{prenet_forward.1} parent=11 // pred_check
          %p182 = pneg %p86
        $region18: #{prenet_forward.1} parent=11 // pred_check_branch
          %184 = sbr.rel (%p182) target = $region20
        $region19: #{prenet_forward.1} parent=11 // pred_region
          _
        $region20: #{prenet_forward.1} parent=11 // pred_fallthru
          _
        // Predicated region
        $region21: #{prenet_forward.1} parent=11 // pred_check
          %p185 = pneg %p107
        $region22: #{prenet_forward.1} parent=11 // pred_check_branch
          %187 = sbr.rel (%p185) target = $region24
        $region23: #{prenet_forward.1} parent=11 // pred_region
          %s189 = ssub.s32 4096, 4096
          %190 = vsyncadd [#allocation6], %s189
          %s191 = sshll.u32 [#allocation7], 4
          %s192 = int_to_ptr.vmem [resolvable:$true] %s191
          %197 = dma.hbm_to_vmem [thread:$0]  %s3, 4096, %s192, [#allocation6], 128, 128, 8
        $region24: #{prenet_forward.1} parent=11 // pred_fallthru
          _
        // Predicated region
        $region25: #{prenet_forward.1} parent=11 // pred_check
          %p198 = pneg %p128
        $region26: #{prenet_forward.1} parent=11 // pred_check_branch
          %200 = sbr.rel (%p198) target = $region28
        $region27: #{prenet_forward.1} parent=11 // pred_region
          _
        $region28: #{prenet_forward.1} parent=11 // pred_fallthru
          _
      $region12: #{prenet_forward.1} parent=5 // pred_fallthru
        _
      %p201 = scmp.lt.s32.totalorder %s18, 2
      // Predicated region
      $region29: #{prenet_forward.1} parent=5 // pred_check
        %p202 = pneg %p201
      $region30: #{prenet_forward.1} parent=5 // pred_check_branch
        %204 = sbr.rel (%p202) target = $region32
      $region31: #{prenet_forward.1} parent=5 // pred_region
        // Predicated region
        $region33: #{prenet_forward.1} parent=31 // pred_check
          %p205 = pneg %p38
        $region34: #{prenet_forward.1} parent=31 // pred_check_branch
          %207 = sbr.rel (%p205) target = $region36
        $region35: #{prenet_forward.1} parent=31 // pred_region
          %s208 = sand.u32 %s28, 1
          %s209 = scalar_lea.sflag [#allocation3], %s208
          %s210 = sand.u32 %s28, 1
          %s211 = smul.addr %s210, 8
          %s212 = scalar_lea.vmem [#allocation2], %s211
          %s214 = ssub.s32 128, 128
          %215 = vsyncadd %s209, %s214
          %s216 = smul.addr %s18, 128
          %s217 = scalar_lea.hbm %s0, %s216
          %s219 = sshll.u32 %s212, 4
          %s220 = int_to_ptr.vmem [resolvable:$true] %s219
          %222 = dma.hbm_to_vmem [thread:$0]  %s217, 128, %s220, %s209
        $region36: #{prenet_forward.1} parent=31 // pred_fallthru
          _
      $region32: #{prenet_forward.1} parent=5 // pred_fallthru
        _
      %p223 = scmp.le.s32.totalorder 1, %s18
      %p224 = scmp.lt.s32.totalorder %s18, 3
      %p225 = pnand %p223, %p224
      %p226 = pneg %p225
      // Predicated region
      $region37: #{prenet_forward.1} parent=5 // pred_check
        _
      $region38: #{prenet_forward.1} parent=5 // pred_check_branch
        %228 = sbr.rel (%p225) target = $region40
      $region39: #{prenet_forward.1} parent=5 // pred_region
        %s229 = ssub.s32 %s18, 1
        %s230 = sand.u32 %s31, 1
        %s231 = scalar_lea.sflag [#allocation3], %s230
        %s232 = sand.u32 %s31, 1
        %s233 = smul.addr %s232, 8
        %s234 = scalar_lea.vmem [#allocation2], %s233
        // Predicated region
        $region41: #{prenet_forward.1} parent=39 // pred_check
          %p235 = pneg %p44
        $region42: #{prenet_forward.1} parent=39 // pred_check_branch
          %237 = sbr.rel (%p235) target = $region44
        $region43: #{prenet_forward.1} parent=39 // pred_region
          %238 = dma.done %s231, 128
        $region44: #{prenet_forward.1} parent=39 // pred_fallthru
          _
        // Predicated region
        $region45: #{prenet_forward.1} parent=39 // pred_check
          %p239 = pneg %p65
        $region46: #{prenet_forward.1} parent=39 // pred_check_branch
          %241 = sbr.rel (%p239) target = $region48
        $region47: #{prenet_forward.1} parent=39 // pred_region
          %242 = dma.done [#allocation6], 1280
        $region48: #{prenet_forward.1} parent=39 // pred_fallthru
          _
        // Predicated region
        $region49: #{prenet_forward.1} parent=39 // pred_check
          %p243 = pneg %p107
        $region50: #{prenet_forward.1} parent=39 // pred_check_branch
          %245 = sbr.rel (%p243) target = $region52
        $region51: #{prenet_forward.1} parent=39 // pred_region
          %246 = dma.done [#allocation6], 4096
        $region52: #{prenet_forward.1} parent=39 // pred_fallthru
          _
        %s247 = sand.u32 %s31, 1
        %s248 = scalar_lea.sflag [#allocation3], %s247
        %s249 = sand.u32 %s31, 1
        %s250 = smul.addr %s249, 8
        %s251 = scalar_lea.vmem [#allocation2], %s250
        %p252 = pneg %p44
        %p253 = pneg %p41
        %p254 = pneg %p65
        %p255 = pneg %p62
        %p256 = pneg %p86
        %p257 = pneg %p83
        %p258 = pneg %p107
        %p259 = pneg %p104
        %p260 = pneg %p128
        %p261 = pneg %p125
        %p262 = pneg %p154
        %p263 = pneg %p151
        %s264 = sand.u32 %s141, 1
        %s265 = scalar_lea.sflag [#allocation4], %s264
        %s266 = sand.u32 %s141, 1
        %s267 = smul.addr %s266, 16
        %s268 = scalar_lea.vmem [#allocation8], %s267
        %v270 = vld [vmem:[%s234] sm:$0xff]
        %v271 = vpack.c.bf16 %v270, %v270
        %v272 = vld [vmem:[#allocation5] sm:$0xff]
        %v273 = vld [vmem:[#allocation5 + $0x8] sm:$0xff]
        %v274 = vld [vmem:[#allocation5 + $0x10] sm:$0xff]
        %v275 = vld [vmem:[#allocation5 + $0x18] sm:$0xff]
        %v276 = vld [vmem:[#allocation5 + $0x20] sm:$0xff]
        %v277 = vld [vmem:[#allocation5 + $0x28] sm:$0xff]
        %v278 = vld [vmem:[#allocation5 + $0x30] sm:$0xff]
        %v279 = vld [vmem:[#allocation5 + $0x38] sm:$0xff]
        %v280 = vld [vmem:[#allocation5 + $0x40] sm:$0xff]
        %v281 = vld [vmem:[#allocation5 + $0x48] sm:$0xff]
        %v282 = vld [vmem:[%s2] sm:$0x3]
        %v284 = vlaneseq
        %v285 = vshrl.u32 %v284, 7
        %v286 = vsub.s32 0, %v285
        %v287 = vrot.slane %v282, %v286
        %v288 = vlaneseq
        %v289 = vshrl.u32 %v288, 7
        %v290 = vsub.s32 1, %v289
        %v291 = vrot.slane %v282, %v290
        %v304 = vunpack.c.l.b16 %v272
        %v305 = vunpack.c.h.b16 %v272
        %v306 = vunpack.c.l.b16 %v273
        %v307 = vunpack.c.h.b16 %v273
        %v308 = vunpack.c.l.b16 %v274
        %v309 = vunpack.c.h.b16 %v274
        %v310 = vunpack.c.l.b16 %v275
        %v311 = vunpack.c.h.b16 %v275
        %v312 = vunpack.c.l.b16 %v276
        %v313 = vunpack.c.h.b16 %v276
        %v314 = vunpack.c.l.b16 %v277
        %v315 = vunpack.c.h.b16 %v277
        %v316 = vunpack.c.l.b16 %v278
        %v317 = vunpack.c.h.b16 %v278
        %v318 = vunpack.c.l.b16 %v279
        %v319 = vunpack.c.h.b16 %v279
        %v320 = vunpack.c.l.b16 %v280
        %v321 = vunpack.c.h.b16 %v280
        %v322 = vunpack.c.l.b16 %v281
        %v323 = vunpack.c.h.b16 %v281
        %v324 = vpack.c.b16 %v306, %v304
        %v325 = vpack.c.b16 %v307, %v305
        %v326 = vpack.c.b16 %v310, %v308
        %v327 = vpack.c.b16 %v311, %v309
        %v328 = vpack.c.b16 %v314, %v312
        %v329 = vpack.c.b16 %v315, %v313
        %v330 = vpack.c.b16 %v318, %v316
        %v331 = vpack.c.b16 %v319, %v317
        %v332 = vpack.c.b16 %v322, %v320
        %v333 = vpack.c.b16 %v323, %v321
        %vm344 = vcmask 654336
        %v346 = vsel %vm344, %v271, 0
        %348 = vmatprep.subr.bf16.mxu0 0
        %349 = vmatpush1.bf16.msra.mxu0 0
        %350 = vmatprep.subr.bf16.mxu0 0
        %351 = vmatpush1.bf16.msra.mxu0 0
        %352 = vmatprep.subr.bf16.mxu0 0
        %353 = vmatpush1.bf16.msra.mxu0 0
        %354 = vmatprep.subr.bf16.mxu0 %v333
        %355 = vmatpush1.bf16.msra.mxu0 %v332
        %356 = vmatprep.subr.bf16.mxu0 %v331
        %357 = vmatpush1.bf16.msra.mxu0 %v330
        %358 = vmatprep.subr.bf16.mxu0 %v329
        %359 = vmatpush1.bf16.msra.mxu0 %v328
        %360 = vmatprep.subr.bf16.mxu0 %v327
        %361 = vmatpush1.bf16.msra.mxu0 %v326
        %362 = vmatprep.subr.bf16.mxu0 %v325
        %363 = vmatpush1.bf16.msra.mxu0 %v324
        %364 = vmatprep.subr.bf16.mxu0 0
        %365 = vmatpush2.bf16.msra.mxu0 0
        %366 = vmatprep.subr.bf16.mxu0 0
        %367 = vmatpush2.bf16.msra.mxu0 0
        %368 = vmatprep.subr.bf16.mxu0 0
        %369 = vmatpush2.bf16.msra.mxu0 0
        %370 = vmatprep.subr.bf16.mxu0 0
        %371 = vmatpush2.bf16.msra.mxu0 0
        %372 = vmatprep.subr.bf16.mxu0 0
        %373 = vmatpush2.bf16.msra.mxu0 0
        %374 = vmatprep.subr.bf16.mxu0 0
        %375 = vmatpush2.bf16.msra.mxu0 0
        %376 = vmatprep.subr.bf16.mxu0 0
        %377 = vmatpush2.bf16.msra.mxu0 0
        %378 = vmatprep.subr.bf16.mxu0 0
        %379 = vmatpush2.bf16.msra.mxu0 0
        %380 = vmatprep.mubr.bf16.mxu0 0
        %381 = vmatmul.mubr.bf16.gmra.mxu0 %v346
        %v382 = vpop.f32.mrf.mxu0
        %v383 = vadd.f32 %v287, %v382
        %v384 = vpop.f32.mrf.mxu0
        %v385 = vadd.f32 %v291, %v384
        %v386 = vpop.f32.mrf.mxu0
        %v387 = vpop.f32.mrf.mxu0
        %388 = vdwg.mxu0
        %v389 = vmax.f32 %v383, 0.0
        %v390 = vmax.f32 %v385, 0.0
        %v391 = vpack.c.bf16 %v389, %v389
        %v392 = vpack.c.bf16 %v390, %v390
        %v393 = vld [vmem:[#allocation7] sm:$0xff]
        %v394 = vld [vmem:[#allocation7 + $0x8] sm:$0xff]
        %v395 = vld [vmem:[#allocation7 + $0x10] sm:$0xff]
        %v396 = vld [vmem:[#allocation7 + $0x18] sm:$0xff]
        %v397 = vld [vmem:[#allocation7 + $0x20] sm:$0xff]
        %v398 = vld [vmem:[#allocation7 + $0x28] sm:$0xff]
        %v399 = vld [vmem:[#allocation7 + $0x30] sm:$0xff]
        %v400 = vld [vmem:[#allocation7 + $0x38] sm:$0xff]
        %v401 = vld [vmem:[#allocation7 + $0x40] sm:$0xff]
        %v402 = vld [vmem:[#allocation7 + $0x48] sm:$0xff]
        %v403 = vld [vmem:[#allocation7 + $0x50] sm:$0xff]
        %v404 = vld [vmem:[#allocation7 + $0x58] sm:$0xff]
        %v405 = vld [vmem:[#allocation7 + $0x60] sm:$0xff]
        %v406 = vld [vmem:[#allocation7 + $0x68] sm:$0xff]
        %v407 = vld [vmem:[#allocation7 + $0x70] sm:$0xff]
        %v408 = vld [vmem:[#allocation7 + $0x78] sm:$0xff]
        %v409 = vld [vmem:[#allocation7 + $0x80] sm:$0xff]
        %v410 = vld [vmem:[#allocation7 + $0x88] sm:$0xff]
        %v411 = vld [vmem:[#allocation7 + $0x90] sm:$0xff]
        %v412 = vld [vmem:[#allocation7 + $0x98] sm:$0xff]
        %v413 = vld [vmem:[#allocation7 + $0xa0] sm:$0xff]
        %v414 = vld [vmem:[#allocation7 + $0xa8] sm:$0xff]
        %v415 = vld [vmem:[#allocation7 + $0xb0] sm:$0xff]
        %v416 = vld [vmem:[#allocation7 + $0xb8] sm:$0xff]
        %v417 = vld [vmem:[#allocation7 + $0xc0] sm:$0xff]
        %v418 = vld [vmem:[#allocation7 + $0xc8] sm:$0xff]
        %v419 = vld [vmem:[#allocation7 + $0xd0] sm:$0xff]
        %v420 = vld [vmem:[#allocation7 + $0xd8] sm:$0xff]
        %v421 = vld [vmem:[#allocation7 + $0xe0] sm:$0xff]
        %v422 = vld [vmem:[#allocation7 + $0xe8] sm:$0xff]
        %v423 = vld [vmem:[#allocation7 + $0xf0] sm:$0xff]
        %v424 = vld [vmem:[#allocation7 + $0xf8] sm:$0xff]
        %v425 = vld [vmem:[%s4] sm:$0x3]
        %v427 = vlaneseq
        %v428 = vshrl.u32 %v427, 7
        %v429 = vsub.s32 0, %v428
        %v430 = vrot.slane %v425, %v429
        %v431 = vlaneseq
        %v432 = vshrl.u32 %v431, 7
        %v433 = vsub.s32 1, %v432
        %v434 = vrot.slane %v425, %v433
        %v469 = vunpack.c.l.b16 %v393
        %v470 = vunpack.c.h.b16 %v393
        %v471 = vunpack.c.l.b16 %v394
        %v472 = vunpack.c.h.b16 %v394
        %v473 = vunpack.c.l.b16 %v395
        %v474 = vunpack.c.h.b16 %v395
        %v475 = vunpack.c.l.b16 %v396
        %v476 = vunpack.c.h.b16 %v396
        %v477 = vunpack.c.l.b16 %v397
        %v478 = vunpack.c.h.b16 %v397
        %v479 = vunpack.c.l.b16 %v398
        %v480 = vunpack.c.h.b16 %v398
        %v481 = vunpack.c.l.b16 %v399
        %v482 = vunpack.c.h.b16 %v399
        %v483 = vunpack.c.l.b16 %v400
        %v484 = vunpack.c.h.b16 %v400
        %v485 = vunpack.c.l.b16 %v401
        %v486 = vunpack.c.h.b16 %v401
        %v487 = vunpack.c.l.b16 %v402
        %v488 = vunpack.c.h.b16 %v402
        %v489 = vunpack.c.l.b16 %v403
        %v490 = vunpack.c.h.b16 %v403
        %v491 = vunpack.c.l.b16 %v404
        %v492 = vunpack.c.h.b16 %v404
        %v493 = vunpack.c.l.b16 %v405
        %v494 = vunpack.c.h.b16 %v405
        %v495 = vunpack.c.l.b16 %v406
        %v496 = vunpack.c.h.b16 %v406
        %v497 = vunpack.c.l.b16 %v407
        %v498 = vunpack.c.h.b16 %v407
        %v499 = vunpack.c.l.b16 %v408
        %v500 = vunpack.c.h.b16 %v408
        %v501 = vunpack.c.l.b16 %v409
        %v502 = vunpack.c.h.b16 %v409
        %v503 = vunpack.c.l.b16 %v410
        %v504 = vunpack.c.h.b16 %v410
        %v505 = vunpack.c.l.b16 %v411
        %v506 = vunpack.c.h.b16 %v411
        %v507 = vunpack.c.l.b16 %v412
        %v508 = vunpack.c.h.b16 %v412
        %v509 = vunpack.c.l.b16 %v413
        %v510 = vunpack.c.h.b16 %v413
        %v511 = vunpack.c.l.b16 %v414
        %v512 = vunpack.c.h.b16 %v414
        %v513 = vunpack.c.l.b16 %v415
        %v514 = vunpack.c.h.b16 %v415
        %v515 = vunpack.c.l.b16 %v416
        %v516 = vunpack.c.h.b16 %v416
        %v517 = vunpack.c.l.b16 %v417
        %v518 = vunpack.c.h.b16 %v417
        %v519 = vunpack.c.l.b16 %v418
        %v520 = vunpack.c.h.b16 %v418
        %v521 = vunpack.c.l.b16 %v419
        %v522 = vunpack.c.h.b16 %v419
        %v523 = vunpack.c.l.b16 %v420
        %v524 = vunpack.c.h.b16 %v420
        %v525 = vunpack.c.l.b16 %v421
        %v526 = vunpack.c.h.b16 %v421
        %v527 = vunpack.c.l.b16 %v422
        %v528 = vunpack.c.h.b16 %v422
        %v529 = vunpack.c.l.b16 %v423
        %v530 = vunpack.c.h.b16 %v423
        %v531 = vunpack.c.l.b16 %v424
        %v532 = vunpack.c.h.b16 %v424
        %v533 = vpack.c.b16 %v471, %v469
        %v534 = vpack.c.b16 %v472, %v470
        %v535 = vpack.c.b16 %v475, %v473
        %v536 = vpack.c.b16 %v476, %v474
        %v537 = vpack.c.b16 %v479, %v477
        %v538 = vpack.c.b16 %v480, %v478
        %v539 = vpack.c.b16 %v483, %v481
        %v540 = vpack.c.b16 %v484, %v482
        %v541 = vpack.c.b16 %v487, %v485
        %v542 = vpack.c.b16 %v488, %v486
        %v543 = vpack.c.b16 %v491, %v489
        %v544 = vpack.c.b16 %v492, %v490
        %v545 = vpack.c.b16 %v495, %v493
        %v546 = vpack.c.b16 %v496, %v494
        %v547 = vpack.c.b16 %v499, %v497
        %v548 = vpack.c.b16 %v500, %v498
        %v549 = vpack.c.b16 %v503, %v501
        %v550 = vpack.c.b16 %v504, %v502
        %v551 = vpack.c.b16 %v507, %v505
        %v552 = vpack.c.b16 %v508, %v506
        %v553 = vpack.c.b16 %v511, %v509
        %v554 = vpack.c.b16 %v512, %v510
        %v555 = vpack.c.b16 %v515, %v513
        %v556 = vpack.c.b16 %v516, %v514
        %v557 = vpack.c.b16 %v519, %v517
        %v558 = vpack.c.b16 %v520, %v518
        %v559 = vpack.c.b16 %v523, %v521
        %v560 = vpack.c.b16 %v524, %v522
        %v561 = vpack.c.b16 %v527, %v525
        %v562 = vpack.c.b16 %v528, %v526
        %v563 = vpack.c.b16 %v531, %v529
        %v564 = vpack.c.b16 %v532, %v530
        %597 = vmatprep.subr.bf16.mxu0 %v548
        %598 = vmatpush1.bf16.msra.mxu0 %v547
        %599 = vmatprep.subr.bf16.mxu0 %v546
        %600 = vmatpush1.bf16.msra.mxu0 %v545
        %601 = vmatprep.subr.bf16.mxu0 %v544
        %602 = vmatpush1.bf16.msra.mxu0 %v543
        %603 = vmatprep.subr.bf16.mxu0 %v542
        %604 = vmatpush1.bf16.msra.mxu0 %v541
        %605 = vmatprep.subr.bf16.mxu0 %v540
        %606 = vmatpush1.bf16.msra.mxu0 %v539
        %607 = vmatprep.subr.bf16.mxu0 %v538
        %608 = vmatpush1.bf16.msra.mxu0 %v537
        %609 = vmatprep.subr.bf16.mxu0 %v536
        %610 = vmatpush1.bf16.msra.mxu0 %v535
        %611 = vmatprep.subr.bf16.mxu0 %v534
        %612 = vmatpush1.bf16.msra.mxu0 %v533
        %613 = vmatprep.subr.bf16.mxu0 %v564
        %614 = vmatpush2.bf16.msra.mxu0 %v563
        %615 = vmatprep.subr.bf16.mxu0 %v562
        %616 = vmatpush2.bf16.msra.mxu0 %v561
        %617 = vmatprep.subr.bf16.mxu0 %v560
        %618 = vmatpush2.bf16.msra.mxu0 %v559
        %619 = vmatprep.subr.bf16.mxu0 %v558
        %620 = vmatpush2.bf16.msra.mxu0 %v557
        %621 = vmatprep.subr.bf16.mxu0 %v556
        %622 = vmatpush2.bf16.msra.mxu0 %v555
        %623 = vmatprep.subr.bf16.mxu0 %v554
        %624 = vmatpush2.bf16.msra.mxu0 %v553
        %625 = vmatprep.subr.bf16.mxu0 %v552
        %626 = vmatpush2.bf16.msra.mxu0 %v551
        %627 = vmatprep.subr.bf16.mxu0 %v550
        %628 = vmatpush2.bf16.msra.mxu0 %v549
        %629 = vmatprep.mubr.bf16.mxu0 %v392
        %630 = vmatmul.mubr.bf16.gmra.mxu0 %v391
        %v631 = vpop.f32.mrf.mxu0
        %v632 = vadd.f32 %v430, %v631
        %v633 = vpop.f32.mrf.mxu0
        %v634 = vadd.f32 %v434, %v633
        %v635 = vpop.f32.mrf.mxu0
        %v636 = vpop.f32.mrf.mxu0
        %637 = vdwg.mxu0
        %v638 = vmax.f32 %v632, 0.0
        %v639 = vmax.f32 %v634, 0.0
        %640 = vst [vmem:[%s268] sm:$0xff] %v638
        %641 = vst [vmem:[%s268 + $0x8] sm:$0xff] %v639
        %s642 = sand.u32 %s141, 1
        %s643 = scalar_lea.sflag [#allocation4], %s642
        %s644 = sand.u32 %s141, 1
        %s645 = smul.addr %s644, 16
        %s646 = scalar_lea.vmem [#allocation8], %s645
        // Predicated region
        $region53: #{prenet_forward.1} parent=39 // pred_check
          %p647 = pneg %p151
        $region54: #{prenet_forward.1} parent=39 // pred_check_branch
          %649 = sbr.rel (%p647) target = $region56
        $region55: #{prenet_forward.1} parent=39 // pred_region
          %s651 = ssub.s32 256, 256
          %652 = vsyncadd %s643, %s651
          %s653 = smul.addr %s23, 2
          %s654 = smul.addr %s653, 128
          %s655 = scalar_lea.hbm %s5, %s654
          %s657 = sshll.u32 %s646, 4
          %s658 = int_to_ptr.vmem [resolvable:$true] %s657
          %660 = dma.vmem_to_hbm [thread:$0]  %s658, 256, %s655, %s643
        $region56: #{prenet_forward.1} parent=39 // pred_fallthru
          _
      $region40: #{prenet_forward.1} parent=5 // pred_fallthru
        _
      %p661 = scmp.le.s32.totalorder 2, %s18
      // Predicated region
      $region57: #{prenet_forward.1} parent=5 // pred_check
        %p662 = pneg %p661
      $region58: #{prenet_forward.1} parent=5 // pred_check_branch
        %664 = sbr.rel (%p662) target = $region60
      $region59: #{prenet_forward.1} parent=5 // pred_region
        %s665 = ssub.s32 %s18, 2
        // Predicated region
        $region61: #{prenet_forward.1} parent=59 // pred_check
          %p666 = pneg %p157
        $region62: #{prenet_forward.1} parent=59 // pred_check_branch
          %668 = sbr.rel (%p666) target = $region64
        $region63: #{prenet_forward.1} parent=59 // pred_region
          %s669 = sand.u32 %s142, 1
          %s670 = scalar_lea.sflag [#allocation4], %s669
          %s671 = sand.u32 %s142, 1
          %s672 = smul.addr %s671, 16
          %s673 = scalar_lea.vmem [#allocation8], %s672
          %674 = dma.done %s670, 256
        $region64: #{prenet_forward.1} parent=59 // pred_fallthru
          _
      $region60: #{prenet_forward.1} parent=5 // pred_fallthru
        _
    $region6: #{prenet_forward.1} parent=1 // loop_footer
      %s22 = sadd.s32 1, %s18
    $region7: #{prenet_forward.1} parent=1 // loop_footer_branch
      %17 = sbr.rel target = $region3
    $region8: #{prenet_forward.1} parent=1 // loop_exit
      _
    %675 = vsyncpa [#allocation3], 1
    %s676 = scalar_lea.sflag [#allocation3], 1
    %677 = vsyncpa %s676, 1
    %678 = vsyncpa [#allocation6], 1
    %679 = vsyncpa [#allocation4], 1
    %s680 = scalar_lea.sflag [#allocation4], 1
    %681 = vsyncpa %s680, 1

</llo_original>
